<compile_context>
chip_gen: v7x
topology: tpu7x:2x2x1
jax: 0.10.0
libtpu: 0.0.40
codegen_flags: <defaults>
</compile_context>

<pallas_src>
import functools

import jax
import jax.numpy as jnp
from jax.experimental import pallas as pl
from jax.experimental.pallas import tpu as pltpu

# The 9 weighted transitivity constraints (alpha_idx, beta_idx, gamma_idx)
_TERMS = [(0, 0, 0), (0, 2, 0), (1, 1, 1), (1, 2, 1), (2, 0, 0),
          (2, 1, 1), (2, 2, 2), (2, 3, 3), (3, 2, 3)]
# The 8 "not" constraints (always unweighted)
_NOT_TERMS = [(0, 3, 1), (0, 3, 2), (1, 3, 0), (1, 3, 2),
              (3, 0, 1), (3, 0, 2), (3, 1, 0), (3, 1, 2)]

_VERY_SMALL = 1e-08


def _round_up(x, m):
    return ((x + m - 1) // m) * m


def _log_softmax4(rows):
    # rows: list of 4 (TS, 128) f32 arrays (one per class). Softmax over the
    # class "axis" is done with explicit full-vreg elementwise ops.
    m = jnp.maximum(jnp.maximum(rows[0], rows[1]),
                    jnp.maximum(rows[2], rows[3]))
    z = [r - m for r in rows]
    e = [jnp.exp(zi) for zi in z]
    s = (e[0] + e[1]) + (e[2] + e[3])
    log_s = jnp.log(s)
    ls = [zi - log_s for zi in z]
    return ls, e, s, log_s


def _transitivity_kernel(w_ref, x_ref, out_ref):
    # w_ref: (9,) f32 in SMEM (scalar prefetch).
    # x_ref: (12, TS, 128) VMEM block; rows 0-3 alpha, 4-7 beta, 8-11 gamma,
    #        batch spread over (sublane, lane).
    # out_ref: (TS, 128) dense f32 loss block.
    rows = [x_ref[k].astype(jnp.float32) for k in range(12)]

    la, _, _, _ = _log_softmax4(rows[0:4])
    lb, _, _, _ = _log_softmax4(rows[4:8])
    lg, eg, sg, log_sg = _log_softmax4(rows[8:12])

    # log(1 - softmax(gamma)) = log(clip(sg - eg, eps)) - log(sg):
    # no divide, reuses log(sg) already computed for the log-softmax.
    need_not = sorted({gi for (_, _, gi) in _NOT_TERMS})
    log_not_g = {
        gi: jnp.log(jnp.clip(sg - eg[gi], _VERY_SMALL, None)) - log_sg
        for gi in need_not
    }

    # 4 independent accumulators -> the 17 hinge adds can co-issue on the VALU.
    accs = [None, None, None, None]

    def _acc(slot, term):
        accs[slot] = term if accs[slot] is None else accs[slot] + term

    # Weighted hinge terms: max(0, la[ai] + lb[bi] - lg[gi]) * w[i]
    for i, (ai, bi, gi) in enumerate(_TERMS):
        t = jnp.maximum(0.0, la[ai] + lb[bi] - lg[gi])
        _acc(i % 4, t * w_ref[i])

    # Unweighted "not" hinge terms; each (alpha, beta) pair repeats twice, so
    # precompute the shared la+lb sums once.
    ab_sums = {}
    for (ai, bi, _gi) in _NOT_TERMS:
        if (ai, bi) not in ab_sums:
            ab_sums[(ai, bi)] = la[ai] + lb[bi]
    for j, (ai, bi, gi) in enumerate(_NOT_TERMS):
        t = jnp.maximum(0.0, ab_sums[(ai, bi)] - log_not_g[gi])
        _acc((len(_TERMS) + j) % 4, t)

    out_ref[...] = (accs[0] + accs[1]) + (accs[2] + accs[3])


@functools.partial(jax.jit, static_argnames=("ts",))
def _run(w, x, ts):
    # x: (12, S_pad, 128); one DMA stream per grid step.
    S_pad = x.shape[1]
    grid = (S_pad // ts,)

    return pl.pallas_call(
        _transitivity_kernel,
        out_shape=jax.ShapeDtypeStruct((S_pad, 128), jnp.float32),
        grid_spec=pltpu.PrefetchScalarGridSpec(
            num_scalar_prefetch=1,          # w -> SMEM
            grid=grid,
            in_specs=[
                pl.BlockSpec((12, ts, 128), lambda i, w: (0, i, 0)),
            ],
            out_specs=pl.BlockSpec((ts, 128), lambda i, w: (i, 0)),
        ),
        compiler_params=pltpu.CompilerParams(
            dimension_semantics=("parallel",)),
    )(w, x)


def transitivity_loss_T(alpha_logits, beta_logits, gamma_logits,
                        label_weight_T=None, *, sublane_tile=1024):
    """Forward pass of transitivity_loss_T_. Returns per-example loss (B,)."""
    B = alpha_logits.shape[0]

    # Sublane packing of the (untouched) input dtype: 8 for f32, 16 for bf16.
    packing = max(8, 32 // jnp.dtype(alpha_logits.dtype).itemsize)

    # Choose the sublane tile TS (batch rows of 128 lanes each).
    S_need = -(-B // 128)
    ts = min(int(sublane_tile), _round_up(S_need, packing))
    ts = _round_up(max(ts, packing), packing)
    # v7x megacore: prefer >= 2 grid steps when there is enough data so the
    # "parallel" batch axis can be sharded across both TensorCores.
    if S_need >= 2 * packing and _round_up(S_need, ts) // ts < 2:
        ts = _round_up(-(-S_need // 2), packing)
    S_pad = _round_up(S_need, ts)
    B_pad = S_pad * 128

    # One fused stack + transpose + pad: (3, B, 4) -> (12, B) -> (12, S_pad, 128).
    # Inputs are DMA'd in their original dtype and cast to f32 in the kernel.
    x = jnp.stack([alpha_logits[:, 0:4], beta_logits[:, 0:4],
                   gamma_logits[:, 0:4]], axis=0)           # (3, B, 4)
    x = jnp.transpose(x, (0, 2, 1)).reshape(12, B)          # (12, B)
    if B_pad != B:
        x = jnp.pad(x, ((0, 0), (0, B_pad - B)))
    x = x.reshape(12, S_pad, 128)

    if label_weight_T is None:
        w = jnp.ones((len(_TERMS),), jnp.float32)
    else:
        lw = label_weight_T.astype(jnp.float32)
        idx = jnp.array([ai * 16 + bi * 4 + gi for (ai, bi, gi) in _TERMS],
                        jnp.int32)
        w = (lw.sum() / lw[idx] / 64.0).astype(jnp.float32)

    loss = _run(w, x, ts)                                   # (S_pad, 128)
    return loss.reshape(-1)[:B]


def _reference(alpha_logits, beta_logits, gamma_logits, label_weight_T=None):
    la = jax.nn.log_softmax(alpha_logits[:, 0:4].astype(jnp.float32), axis=1)
    lb = jax.nn.log_softmax(beta_logits[:, 0:4].astype(jnp.float32), axis=1)
    lg = jax.nn.log_softmax(gamma_logits[:, 0:4].astype(jnp.float32), axis=1)
    log_not_g = jnp.log(jnp.clip(1.0 - jnp.exp(lg), _VERY_SMALL, None))
    loss = jnp.zeros((alpha_logits.shape[0],), jnp.float32)
    for (ai, bi, gi) in _TERMS:
        if label_weight_T is None:
            lw = 1.0
        else:
            lw = label_weight_T.sum() / label_weight_T[ai * 16 + bi * 4 + gi] / 64.0
        loss = loss + jnp.maximum(0.0, la[:, ai] + lb[:, bi] - lg[:, gi]) * lw
    for (ai, bi, gi) in _NOT_TERMS:
        loss = loss + jnp.maximum(0.0, la[:, ai] + lb[:, bi] - log_not_g[:, gi])
    return loss


if __name__ == "__main__":
    key = jax.random.PRNGKey(0)
    k1, k2, k3, k4 = jax.random.split(key, 4)
    B, C = 8, 4
    alpha_logits = jax.random.normal(k1, (B, C), jnp.float32)
    beta_logits = jax.random.normal(k2, (B, C), jnp.float32)
    gamma_logits = jax.random.normal(k3, (B, C), jnp.float32)
    label_weight_T = jax.random.uniform(k4, (64,), jnp.float32,
                                        minval=0.5, maxval=2.0)

    # Unweighted path (label_weight_T=None)
    out0 = jax.block_until_ready(
        transitivity_loss_T(alpha_logits, beta_logits, gamma_logits))
    ref0 = _reference(alpha_logits, beta_logits, gamma_logits)
    assert out0.shape == (B,)
    assert jnp.allclose(out0, ref0, atol=1e-5, rtol=1e-5)

    # Weighted path
    out1 = jax.block_until_ready(
        transitivity_loss_T(alpha_logits, beta_logits, gamma_logits,
                            label_weight_T))
    ref1 = _reference(alpha_logits, beta_logits, gamma_logits, label_weight_T)
    assert jnp.allclose(out1, ref1, atol=1e-5, rtol=1e-5)

    # Larger, non-multiple-of-128 batch.  Default tile -> 2-step grid (v7x
    # megacore split); tiny tile -> multi-step grid / padding path.
    kb1, kb2, kb3 = jax.random.split(jax.random.PRNGKey(1), 3)
    B2 = 2500
    a2 = jax.random.normal(kb1, (B2, C), jnp.float32)
    b2 = jax.random.normal(kb2, (B2, C), jnp.float32)
    g2 = jax.random.normal(kb3, (B2, C), jnp.float32)
    ref2 = _reference(a2, b2, g2, label_weight_T)

    out2 = jax.block_until_ready(
        transitivity_loss_T(a2, b2, g2, label_weight_T))
    assert out2.shape == (B2,)
    assert jnp.allclose(out2, ref2, atol=1e-5, rtol=1e-5)

    out3 = jax.block_until_ready(
        transitivity_loss_T(a2, b2, g2, label_weight_T, sublane_tile=8))
    assert jnp.allclose(out3, ref2, atol=1e-5, rtol=1e-5)

    print("KERNEL_OK")
</pallas_src>

<mosaic_0001>
module attributes {stable_mosaic.version = 11 : i64} {
  func.func @_transitivity_kernel(%arg0: i32, %arg1: memref<9xf32, #tpu.memory_space<smem>>, %arg2: memref<12x8x128xf32, #tpu.memory_space<vmem>>, %arg3: memref<8x128xf32, #tpu.memory_space<vmem>>) attributes {dimension_semantics = [#tpu.dimension_semantics<parallel>], iteration_bounds = array<i64: 1>, scalar_prefetch = 1 : i64, scratch_operands = 0 : i64, tpu.core_type = #tpu.core_type<tc>, window_params = [{transform_indices = @transform_0, window_bounds = array<i64: 12, 8, 128>}, {transform_indices = @transform_1, window_bounds = array<i64: 8, 128>}]} {
    %c0 = arith.constant 0 : index
    %c0_0 = arith.constant 0 : index
    %c0_1 = arith.constant 0 : index
    %0 = vector.load %arg2[%c0, %c0_0, %c0_1] : memref<12x8x128xf32, #tpu.memory_space<vmem>>, vector<1x8x128xf32>
    %1 = vector.shape_cast %0 : vector<1x8x128xf32> to vector<8x128xf32>
    %c1 = arith.constant 1 : index
    %c0_2 = arith.constant 0 : index
    %c0_3 = arith.constant 0 : index
    %2 = vector.load %arg2[%c1, %c0_2, %c0_3] : memref<12x8x128xf32, #tpu.memory_space<vmem>>, vector<1x8x128xf32>
    %3 = vector.shape_cast %2 : vector<1x8x128xf32> to vector<8x128xf32>
    %c2 = arith.constant 2 : index
    %c0_4 = arith.constant 0 : index
    %c0_5 = arith.constant 0 : index
    %4 = vector.load %arg2[%c2, %c0_4, %c0_5] : memref<12x8x128xf32, #tpu.memory_space<vmem>>, vector<1x8x128xf32>
    %5 = vector.shape_cast %4 : vector<1x8x128xf32> to vector<8x128xf32>
    %c3 = arith.constant 3 : index
    %c0_6 = arith.constant 0 : index
    %c0_7 = arith.constant 0 : index
    %6 = vector.load %arg2[%c3, %c0_6, %c0_7] : memref<12x8x128xf32, #tpu.memory_space<vmem>>, vector<1x8x128xf32>
    %7 = vector.shape_cast %6 : vector<1x8x128xf32> to vector<8x128xf32>
    %c4 = arith.constant 4 : index
    %c0_8 = arith.constant 0 : index
    %c0_9 = arith.constant 0 : index
    %8 = vector.load %arg2[%c4, %c0_8, %c0_9] : memref<12x8x128xf32, #tpu.memory_space<vmem>>, vector<1x8x128xf32>
    %9 = vector.shape_cast %8 : vector<1x8x128xf32> to vector<8x128xf32>
    %c5 = arith.constant 5 : index
    %c0_10 = arith.constant 0 : index
    %c0_11 = arith.constant 0 : index
    %10 = vector.load %arg2[%c5, %c0_10, %c0_11] : memref<12x8x128xf32, #tpu.memory_space<vmem>>, vector<1x8x128xf32>
    %11 = vector.shape_cast %10 : vector<1x8x128xf32> to vector<8x128xf32>
    %c6 = arith.constant 6 : index
    %c0_12 = arith.constant 0 : index
    %c0_13 = arith.constant 0 : index
    %12 = vector.load %arg2[%c6, %c0_12, %c0_13] : memref<12x8x128xf32, #tpu.memory_space<vmem>>, vector<1x8x128xf32>
    %13 = vector.shape_cast %12 : vector<1x8x128xf32> to vector<8x128xf32>
    %c7 = arith.constant 7 : index
    %c0_14 = arith.constant 0 : index
    %c0_15 = arith.constant 0 : index
    %14 = vector.load %arg2[%c7, %c0_14, %c0_15] : memref<12x8x128xf32, #tpu.memory_space<vmem>>, vector<1x8x128xf32>
    %15 = vector.shape_cast %14 : vector<1x8x128xf32> to vector<8x128xf32>
    %c8 = arith.constant 8 : index
    %c0_16 = arith.constant 0 : index
    %c0_17 = arith.constant 0 : index
    %16 = vector.load %arg2[%c8, %c0_16, %c0_17] : memref<12x8x128xf32, #tpu.memory_space<vmem>>, vector<1x8x128xf32>
    %17 = vector.shape_cast %16 : vector<1x8x128xf32> to vector<8x128xf32>
    %c9 = arith.constant 9 : index
    %c0_18 = arith.constant 0 : index
    %c0_19 = arith.constant 0 : index
    %18 = vector.load %arg2[%c9, %c0_18, %c0_19] : memref<12x8x128xf32, #tpu.memory_space<vmem>>, vector<1x8x128xf32>
    %19 = vector.shape_cast %18 : vector<1x8x128xf32> to vector<8x128xf32>
    %c10 = arith.constant 10 : index
    %c0_20 = arith.constant 0 : index
    %c0_21 = arith.constant 0 : index
    %20 = vector.load %arg2[%c10, %c0_20, %c0_21] : memref<12x8x128xf32, #tpu.memory_space<vmem>>, vector<1x8x128xf32>
    %21 = vector.shape_cast %20 : vector<1x8x128xf32> to vector<8x128xf32>
    %c11 = arith.constant 11 : index
    %c0_22 = arith.constant 0 : index
    %c0_23 = arith.constant 0 : index
    %22 = vector.load %arg2[%c11, %c0_22, %c0_23] : memref<12x8x128xf32, #tpu.memory_space<vmem>>, vector<1x8x128xf32>
    %23 = vector.shape_cast %22 : vector<1x8x128xf32> to vector<8x128xf32>
    %24 = arith.maximumf %1, %3 : vector<8x128xf32>
    %25 = arith.maximumf %5, %7 : vector<8x128xf32>
    %26 = arith.maximumf %24, %25 : vector<8x128xf32>
    %27 = arith.subf %1, %26 : vector<8x128xf32>
    %28 = arith.subf %3, %26 : vector<8x128xf32>
    %29 = arith.subf %5, %26 : vector<8x128xf32>
    %30 = arith.subf %7, %26 : vector<8x128xf32>
    %31 = math.exp %27 : vector<8x128xf32>
    %32 = math.exp %28 : vector<8x128xf32>
    %33 = math.exp %29 : vector<8x128xf32>
    %34 = math.exp %30 : vector<8x128xf32>
    %35 = arith.addf %31, %32 : vector<8x128xf32>
    %36 = arith.addf %33, %34 : vector<8x128xf32>
    %37 = arith.addf %35, %36 : vector<8x128xf32>
    %38 = math.log %37 : vector<8x128xf32>
    %39 = arith.subf %27, %38 : vector<8x128xf32>
    %40 = arith.subf %28, %38 : vector<8x128xf32>
    %41 = arith.subf %29, %38 : vector<8x128xf32>
    %42 = arith.subf %30, %38 : vector<8x128xf32>
    %43 = arith.maximumf %9, %11 : vector<8x128xf32>
    %44 = arith.maximumf %13, %15 : vector<8x128xf32>
    %45 = arith.maximumf %43, %44 : vector<8x128xf32>
    %46 = arith.subf %9, %45 : vector<8x128xf32>
    %47 = arith.subf %11, %45 : vector<8x128xf32>
    %48 = arith.subf %13, %45 : vector<8x128xf32>
    %49 = arith.subf %15, %45 : vector<8x128xf32>
    %50 = math.exp %46 : vector<8x128xf32>
    %51 = math.exp %47 : vector<8x128xf32>
    %52 = math.exp %48 : vector<8x128xf32>
    %53 = math.exp %49 : vector<8x128xf32>
    %54 = arith.addf %50, %51 : vector<8x128xf32>
    %55 = arith.addf %52, %53 : vector<8x128xf32>
    %56 = arith.addf %54, %55 : vector<8x128xf32>
    %57 = math.log %56 : vector<8x128xf32>
    %58 = arith.subf %46, %57 : vector<8x128xf32>
    %59 = arith.subf %47, %57 : vector<8x128xf32>
    %60 = arith.subf %48, %57 : vector<8x128xf32>
    %61 = arith.subf %49, %57 : vector<8x128xf32>
    %62 = arith.maximumf %17, %19 : vector<8x128xf32>
    %63 = arith.maximumf %21, %23 : vector<8x128xf32>
    %64 = arith.maximumf %62, %63 : vector<8x128xf32>
    %65 = arith.subf %17, %64 : vector<8x128xf32>
    %66 = arith.subf %19, %64 : vector<8x128xf32>
    %67 = arith.subf %21, %64 : vector<8x128xf32>
    %68 = arith.subf %23, %64 : vector<8x128xf32>
    %69 = math.exp %65 : vector<8x128xf32>
    %70 = math.exp %66 : vector<8x128xf32>
    %71 = math.exp %67 : vector<8x128xf32>
    %72 = math.exp %68 : vector<8x128xf32>
    %73 = arith.addf %69, %70 : vector<8x128xf32>
    %74 = arith.addf %71, %72 : vector<8x128xf32>
    %75 = arith.addf %73, %74 : vector<8x128xf32>
    %76 = math.log %75 : vector<8x128xf32>
    %77 = arith.subf %65, %76 : vector<8x128xf32>
    %78 = arith.subf %66, %76 : vector<8x128xf32>
    %79 = arith.subf %67, %76 : vector<8x128xf32>
    %80 = arith.subf %68, %76 : vector<8x128xf32>
    %81 = arith.subf %75, %69 : vector<8x128xf32>
    %cst = arith.constant 9.99999993E-9 : f32
    %82 = vector.broadcast %cst : f32 to vector<8x128xf32>
    %83 = arith.maximumf %82, %81 : vector<8x128xf32>
    %84 = math.log %83 : vector<8x128xf32>
    %85 = arith.subf %84, %76 : vector<8x128xf32>
    %86 = arith.subf %75, %70 : vector<8x128xf32>
    %cst_24 = arith.constant 9.99999993E-9 : f32
    %87 = vector.broadcast %cst_24 : f32 to vector<8x128xf32>
    %88 = arith.maximumf %87, %86 : vector<8x128xf32>
    %89 = math.log %88 : vector<8x128xf32>
    %90 = arith.subf %89, %76 : vector<8x128xf32>
    %91 = arith.subf %75, %71 : vector<8x128xf32>
    %cst_25 = arith.constant 9.99999993E-9 : f32
    %92 = vector.broadcast %cst_25 : f32 to vector<8x128xf32>
    %93 = arith.maximumf %92, %91 : vector<8x128xf32>
    %94 = math.log %93 : vector<8x128xf32>
    %95 = arith.subf %94, %76 : vector<8x128xf32>
    %96 = arith.addf %39, %58 : vector<8x128xf32>
    %97 = arith.subf %96, %77 : vector<8x128xf32>
    %cst_26 = arith.constant 0.000000e+00 : f32
    %98 = vector.broadcast %cst_26 : f32 to vector<8x128xf32>
    %99 = arith.maximumf %98, %97 : vector<8x128xf32>
    %c0_27 = arith.constant 0 : index
    %100 = memref.load %arg1[%c0_27] : memref<9xf32, #tpu.memory_space<smem>>
    %101 = vector.broadcast %100 : f32 to vector<8x128xf32>
    %102 = arith.mulf %99, %101 : vector<8x128xf32>
    %103 = arith.addf %39, %60 : vector<8x128xf32>
    %104 = arith.subf %103, %77 : vector<8x128xf32>
    %cst_28 = arith.constant 0.000000e+00 : f32
    %105 = vector.broadcast %cst_28 : f32 to vector<8x128xf32>
    %106 = arith.maximumf %105, %104 : vector<8x128xf32>
    %c1_29 = arith.constant 1 : index
    %107 = memref.load %arg1[%c1_29] : memref<9xf32, #tpu.memory_space<smem>>
    %108 = vector.broadcast %107 : f32 to vector<8x128xf32>
    %109 = arith.mulf %106, %108 : vector<8x128xf32>
    %110 = arith.addf %40, %59 : vector<8x128xf32>
    %111 = arith.subf %110, %78 : vector<8x128xf32>
    %cst_30 = arith.constant 0.000000e+00 : f32
    %112 = vector.broadcast %cst_30 : f32 to vector<8x128xf32>
    %113 = arith.maximumf %112, %111 : vector<8x128xf32>
    %c2_31 = arith.constant 2 : index
    %114 = memref.load %arg1[%c2_31] : memref<9xf32, #tpu.memory_space<smem>>
    %115 = vector.broadcast %114 : f32 to vector<8x128xf32>
    %116 = arith.mulf %113, %115 : vector<8x128xf32>
    %117 = arith.addf %40, %60 : vector<8x128xf32>
    %118 = arith.subf %117, %78 : vector<8x128xf32>
    %cst_32 = arith.constant 0.000000e+00 : f32
    %119 = vector.broadcast %cst_32 : f32 to vector<8x128xf32>
    %120 = arith.maximumf %119, %118 : vector<8x128xf32>
    %c3_33 = arith.constant 3 : index
    %121 = memref.load %arg1[%c3_33] : memref<9xf32, #tpu.memory_space<smem>>
    %122 = vector.broadcast %121 : f32 to vector<8x128xf32>
    %123 = arith.mulf %120, %122 : vector<8x128xf32>
    %124 = arith.addf %41, %58 : vector<8x128xf32>
    %125 = arith.subf %124, %77 : vector<8x128xf32>
    %cst_34 = arith.constant 0.000000e+00 : f32
    %126 = vector.broadcast %cst_34 : f32 to vector<8x128xf32>
    %127 = arith.maximumf %126, %125 : vector<8x128xf32>
    %c4_35 = arith.constant 4 : index
    %128 = memref.load %arg1[%c4_35] : memref<9xf32, #tpu.memory_space<smem>>
    %129 = vector.broadcast %128 : f32 to vector<8x128xf32>
    %130 = arith.mulf %127, %129 : vector<8x128xf32>
    %131 = arith.addf %102, %130 : vector<8x128xf32>
    %132 = arith.addf %41, %59 : vector<8x128xf32>
    %133 = arith.subf %132, %78 : vector<8x128xf32>
    %cst_36 = arith.constant 0.000000e+00 : f32
    %134 = vector.broadcast %cst_36 : f32 to vector<8x128xf32>
    %135 = arith.maximumf %134, %133 : vector<8x128xf32>
    %c5_37 = arith.constant 5 : index
    %136 = memref.load %arg1[%c5_37] : memref<9xf32, #tpu.memory_space<smem>>
    %137 = vector.broadcast %136 : f32 to vector<8x128xf32>
    %138 = arith.mulf %135, %137 : vector<8x128xf32>
    %139 = arith.addf %109, %138 : vector<8x128xf32>
    %140 = arith.addf %41, %60 : vector<8x128xf32>
    %141 = arith.subf %140, %79 : vector<8x128xf32>
    %cst_38 = arith.constant 0.000000e+00 : f32
    %142 = vector.broadcast %cst_38 : f32 to vector<8x128xf32>
    %143 = arith.maximumf %142, %141 : vector<8x128xf32>
    %c6_39 = arith.constant 6 : index
    %144 = memref.load %arg1[%c6_39] : memref<9xf32, #tpu.memory_space<smem>>
    %145 = vector.broadcast %144 : f32 to vector<8x128xf32>
    %146 = arith.mulf %143, %145 : vector<8x128xf32>
    %147 = arith.addf %116, %146 : vector<8x128xf32>
    %148 = arith.addf %41, %61 : vector<8x128xf32>
    %149 = arith.subf %148, %80 : vector<8x128xf32>
    %cst_40 = arith.constant 0.000000e+00 : f32
    %150 = vector.broadcast %cst_40 : f32 to vector<8x128xf32>
    %151 = arith.maximumf %150, %149 : vector<8x128xf32>
    %c7_41 = arith.constant 7 : index
    %152 = memref.load %arg1[%c7_41] : memref<9xf32, #tpu.memory_space<smem>>
    %153 = vector.broadcast %152 : f32 to vector<8x128xf32>
    %154 = arith.mulf %151, %153 : vector<8x128xf32>
    %155 = arith.addf %123, %154 : vector<8x128xf32>
    %156 = arith.addf %42, %60 : vector<8x128xf32>
    %157 = arith.subf %156, %80 : vector<8x128xf32>
    %cst_42 = arith.constant 0.000000e+00 : f32
    %158 = vector.broadcast %cst_42 : f32 to vector<8x128xf32>
    %159 = arith.maximumf %158, %157 : vector<8x128xf32>
    %c8_43 = arith.constant 8 : index
    %160 = memref.load %arg1[%c8_43] : memref<9xf32, #tpu.memory_space<smem>>
    %161 = vector.broadcast %160 : f32 to vector<8x128xf32>
    %162 = arith.mulf %159, %161 : vector<8x128xf32>
    %163 = arith.addf %131, %162 : vector<8x128xf32>
    %164 = arith.addf %39, %61 : vector<8x128xf32>
    %165 = arith.addf %40, %61 : vector<8x128xf32>
    %166 = arith.addf %42, %58 : vector<8x128xf32>
    %167 = arith.addf %42, %59 : vector<8x128xf32>
    %168 = arith.subf %164, %90 : vector<8x128xf32>
    %cst_44 = arith.constant 0.000000e+00 : f32
    %169 = vector.broadcast %cst_44 : f32 to vector<8x128xf32>
    %170 = arith.maximumf %169, %168 : vector<8x128xf32>
    %171 = arith.addf %139, %170 : vector<8x128xf32>
    %172 = arith.subf %164, %95 : vector<8x128xf32>
    %cst_45 = arith.constant 0.000000e+00 : f32
    %173 = vector.broadcast %cst_45 : f32 to vector<8x128xf32>
    %174 = arith.maximumf %173, %172 : vector<8x128xf32>
    %175 = arith.addf %147, %174 : vector<8x128xf32>
    %176 = arith.subf %165, %85 : vector<8x128xf32>
    %cst_46 = arith.constant 0.000000e+00 : f32
    %177 = vector.broadcast %cst_46 : f32 to vector<8x128xf32>
    %178 = arith.maximumf %177, %176 : vector<8x128xf32>
    %179 = arith.addf %155, %178 : vector<8x128xf32>
    %180 = arith.subf %165, %95 : vector<8x128xf32>
    %cst_47 = arith.constant 0.000000e+00 : f32
    %181 = vector.broadcast %cst_47 : f32 to vector<8x128xf32>
    %182 = arith.maximumf %181, %180 : vector<8x128xf32>
    %183 = arith.addf %163, %182 : vector<8x128xf32>
    %184 = arith.subf %166, %90 : vector<8x128xf32>
    %cst_48 = arith.constant 0.000000e+00 : f32
    %185 = vector.broadcast %cst_48 : f32 to vector<8x128xf32>
    %186 = arith.maximumf %185, %184 : vector<8x128xf32>
    %187 = arith.addf %171, %186 : vector<8x128xf32>
    %188 = arith.subf %166, %95 : vector<8x128xf32>
    %cst_49 = arith.constant 0.000000e+00 : f32
    %189 = vector.broadcast %cst_49 : f32 to vector<8x128xf32>
    %190 = arith.maximumf %189, %188 : vector<8x128xf32>
    %191 = arith.addf %175, %190 : vector<8x128xf32>
    %192 = arith.subf %167, %85 : vector<8x128xf32>
    %cst_50 = arith.constant 0.000000e+00 : f32
    %193 = vector.broadcast %cst_50 : f32 to vector<8x128xf32>
    %194 = arith.maximumf %193, %192 : vector<8x128xf32>
    %195 = arith.addf %179, %194 : vector<8x128xf32>
    %196 = arith.subf %167, %95 : vector<8x128xf32>
    %cst_51 = arith.constant 0.000000e+00 : f32
    %197 = vector.broadcast %cst_51 : f32 to vector<8x128xf32>
    %198 = arith.maximumf %197, %196 : vector<8x128xf32>
    %199 = arith.addf %183, %198 : vector<8x128xf32>
    %200 = arith.addf %199, %187 : vector<8x128xf32>
    %201 = arith.addf %191, %195 : vector<8x128xf32>
    %202 = arith.addf %200, %201 : vector<8x128xf32>
    %c0_52 = arith.constant 0 : index
    %c0_53 = arith.constant 0 : index
    %203 = vector.load %arg3[%c0_52, %c0_53] : memref<8x128xf32, #tpu.memory_space<vmem>>, vector<8x128xf32>
    tpu.vector_store %arg3[%c0_52, %c0_53], %202 {strides = array<i32>} : memref<8x128xf32, #tpu.memory_space<vmem>>, vector<8x128xf32>,
    return
  }
  func.func @transform_0(%arg0: i32, %arg1: memref<9xf32, #tpu.memory_space<smem>>) -> (i32, i32, i32) {
    %c0_i32 = arith.constant 0 : i32
    %c0_i32_0 = arith.constant 0 : i32
    %c0_i32_1 = arith.constant 0 : i32
    return %c0_i32, %arg0, %c0_i32_0 : i32, i32, i32
  }
  func.func @transform_1(%arg0: i32, %arg1: memref<9xf32, #tpu.memory_space<smem>>) -> (i32, i32) {
    %c0_i32 = arith.constant 0 : i32
    %c0_i32_0 = arith.constant 0 : i32
    return %arg0, %c0_i32 : i32, i32
  }
}

</mosaic_0001>

<llo_original>
// kernel: _run.1
$region0: #{_run.1}
  #allocation0 [shape = 'u32[]', space=smem, size = 0x4, offset = 0x4, fixed_abs, tag = 'smem constant byte address 0x4 - core index']
  #allocation1 [shape = 'u32[144,128]{1,0:T(1,128)}', space=vmem, size = 0x12000, scoped, tag = 'internal scratch']
  #allocation2 [shape = 's32[1]{0}', space=sflag, size = 0x4, scoped, tag = 'scoped memory for _run.1']
  #allocation3 [shape = 'u8[512]{0}', space=smem, size = 0x200, scoped, tag = 'prefetched SMEM operand 0']
  %s0 = inlined_call_operand.hbm [shape: f32[9], index: 0, kind: input, shape index: {}]
  %s1 = inlined_call_operand.hbm [shape: f32[12,8,128], index: 1, kind: input, shape index: {}]
  %s2 = inlined_call_operand.hbm [shape: f32[8,128], index: 2, kind: output, shape index: {}]
  %s3 = sld [smem:[#allocation0]]
  $region18: #{_run.1} parent=0
    _
  %s5 = ssub.s32 1, %s3
  %s6 = scalar_select 0, %s5, %s3
  %8 = dma.hbm_to_smem %s0, 16, [#allocation3], [#allocation2]
  %9 = dma.done [#allocation2], 16
  %10 = sfence
  $region1: #{_run.1} parent=0
    #allocation4 [shape = 'u8[49152]{0}', space=vmem, size = 0xc000, scoped, tag = 'input window, operand 1, single buffered']
    #allocation5 [shape = 's32[1]{0}', space=sflag, size = 0x4, scoped, tag = 'scoped memory for _run.1']
    #allocation6 [shape = 's32[1]{0}', space=sflag, size = 0x4, scoped, tag = 'scoped memory for _run.1']
    #allocation7 [shape = 'u8[4096]{0}', space=vmem, size = 0x1000, scoped, tag = 'output window, operand 0, single buffered']
    %11 = vsyncpa [#allocation5], 0
    %12 = vsyncpa [#allocation6], 0
    // Predicated region
    $region2: #{_run.1} parent=1 // pred_check
      _
    $region3: #{_run.1} parent=1 // pred_check_branch
      %14 = sbr.rel (0) target = $region5
    $region4: #{_run.1} parent=1 // pred_region
      %s16 = ssub.s32 1536, 1536
      %17 = vsyncadd [#allocation5], %s16
      %s18 = sshll.u32 [#allocation4], 4
      %s19 = int_to_ptr.vmem [resolvable:$true] %s18
      %24 = dma.hbm_to_vmem [thread:$0]  %s1, 1536, %s19, [#allocation5], 128, 128, 8
    $region5: #{_run.1} parent=1 // pred_fallthru
      _
    // Predicated region
    $region6: #{_run.1} parent=1 // pred_check
      _
    $region7: #{_run.1} parent=1 // pred_check_branch
      %26 = sbr.rel (0) target = $region9
    $region8: #{_run.1} parent=1 // pred_region
      %27 = dma.done [#allocation5], 1536
    $region9: #{_run.1} parent=1 // pred_fallthru
      _
    %v28 = vld [vmem:[#allocation4] sm:$0xff]
    %s29 = scalar_lea.vmem [#allocation4], 8
    %v30 = vld [vmem:[%s29] sm:$0xff]
    %s31 = scalar_lea.vmem [#allocation4], 16
    %v32 = vld [vmem:[%s31] sm:$0xff]
    %s33 = scalar_lea.vmem [#allocation4], 24
    %v34 = vld [vmem:[%s33] sm:$0xff]
    %s35 = scalar_lea.vmem [#allocation4], 32
    %v36 = vld [vmem:[%s35] sm:$0xff]
    %s37 = scalar_lea.vmem [#allocation4], 40
    %v38 = vld [vmem:[%s37] sm:$0xff]
    %s39 = scalar_lea.vmem [#allocation4], 48
    %v40 = vld [vmem:[%s39] sm:$0xff]
    %s41 = scalar_lea.vmem [#allocation4], 56
    %v42 = vld [vmem:[%s41] sm:$0xff]
    %s43 = scalar_lea.vmem [#allocation4], 64
    %v44 = vld [vmem:[%s43] sm:$0xff]
    %s45 = scalar_lea.vmem [#allocation4], 72
    %v46 = vld [vmem:[%s45] sm:$0xff]
    %s47 = scalar_lea.vmem [#allocation4], 80
    %v48 = vld [vmem:[%s47] sm:$0xff]
    %s49 = scalar_lea.vmem [#allocation4], 88
    %v50 = vld [vmem:[%s49] sm:$0xff]
    %v51 = vmax.f32 %v28, %v30
    %v52 = vmax.f32 %v32, %v34
    %v53 = vmax.f32 %v51, %v52
    %v54 = vsub.f32 %v28, %v53
    %v55 = vsub.f32 %v30, %v53
    %v56 = vsub.f32 %v32, %v53
    %v57 = vsub.f32 %v34, %v53
    %v58 = vmul.f32 %v54, 1.442695
    %v59 = vpow.pop %v58
    %v60 = vmul.f32 %v55, 1.442695
    %v61 = vpow.pop %v60
    %v62 = vmul.f32 %v56, 1.442695
    %v63 = vpow.pop %v62
    %v64 = vmul.f32 %v57, 1.442695
    %v65 = vpow.pop %v64
    %v66 = vadd.f32 %v59, %v61
    %v67 = vadd.f32 %v63, %v65
    %v68 = vadd.f32 %v66, %v67
    %v69 = vlog2.pop %v68
    %v70 = vmul.f32 %v69, 0.6931472
    %v71 = vsub.f32 %v54, %v70
    %v72 = vsub.f32 %v55, %v70
    %v73 = vsub.f32 %v56, %v70
    %v74 = vsub.f32 %v57, %v70
    %v75 = vmax.f32 %v36, %v38
    %v76 = vmax.f32 %v40, %v42
    %v77 = vmax.f32 %v75, %v76
    %v78 = vsub.f32 %v36, %v77
    %v79 = vsub.f32 %v38, %v77
    %v80 = vsub.f32 %v40, %v77
    %v81 = vsub.f32 %v42, %v77
    %v82 = vmul.f32 %v78, 1.442695
    %v83 = vpow.pop %v82
    %v84 = vmul.f32 %v79, 1.442695
    %v85 = vpow.pop %v84
    %v86 = vmul.f32 %v80, 1.442695
    %v87 = vpow.pop %v86
    %v88 = vmul.f32 %v81, 1.442695
    %v89 = vpow.pop %v88
    %v90 = vadd.f32 %v83, %v85
    %v91 = vadd.f32 %v87, %v89
    %v92 = vadd.f32 %v90, %v91
    %v93 = vlog2.pop %v92
    %v94 = vmul.f32 %v93, 0.6931472
    %v95 = vsub.f32 %v78, %v94
    %v96 = vsub.f32 %v79, %v94
    %v97 = vsub.f32 %v80, %v94
    %v98 = vsub.f32 %v81, %v94
    %v99 = vmax.f32 %v44, %v46
    %v100 = vmax.f32 %v48, %v50
    %v101 = vmax.f32 %v99, %v100
    %v102 = vsub.f32 %v44, %v101
    %v103 = vsub.f32 %v46, %v101
    %v104 = vsub.f32 %v48, %v101
    %v105 = vsub.f32 %v50, %v101
    %v106 = vmul.f32 %v102, 1.442695
    %v107 = vpow.pop %v106
    %v108 = vmul.f32 %v103, 1.442695
    %v109 = vpow.pop %v108
    %v110 = vmul.f32 %v104, 1.442695
    %v111 = vpow.pop %v110
    %v112 = vmul.f32 %v105, 1.442695
    %v113 = vpow.pop %v112
    %v114 = vadd.f32 %v107, %v109
    %v115 = vadd.f32 %v111, %v113
    %v116 = vadd.f32 %v114, %v115
    %v117 = vlog2.pop %v116
    %v118 = vmul.f32 %v117, 0.6931472
    %v119 = vsub.f32 %v102, %v118
    %v120 = vsub.f32 %v103, %v118
    %v121 = vsub.f32 %v104, %v118
    %v122 = vsub.f32 %v105, %v118
    %v123 = vsub.f32 %v116, %v107
    %v124 = vmax.f32 %v123, 1e-08
    %v125 = vlog2.pop %v124
    %v126 = vmul.f32 %v125, 0.6931472
    %v127 = vsub.f32 %v126, %v118
    %v128 = vsub.f32 %v116, %v109
    %v129 = vmax.f32 %v128, 1e-08
    %v130 = vlog2.pop %v129
    %v131 = vmul.f32 %v130, 0.6931472
    %v132 = vsub.f32 %v131, %v118
    %v133 = vsub.f32 %v116, %v111
    %v134 = vmax.f32 %v133, 1e-08
    %v135 = vlog2.pop %v134
    %v136 = vmul.f32 %v135, 0.6931472
    %v137 = vsub.f32 %v136, %v118
    %v138 = vadd.f32 %v71, %v95
    %v139 = vsub.f32 %v138, %v119
    %v140 = vmax.f32 %v139, 0.0
    %s141 = sld [smem:[#allocation3]]
    %v142 = vstv %s141
    %v143 = vmul.f32 %v140, %v142
    %v144 = vadd.f32 %v71, %v97
    %v145 = vsub.f32 %v144, %v119
    %v146 = vmax.f32 %v145, 0.0
    %s147 = sld [smem:[#allocation3 + $0x1]]
    %v148 = vstv %s147
    %v149 = vmul.f32 %v146, %v148
    %v150 = vadd.f32 %v72, %v96
    %v151 = vsub.f32 %v150, %v120
    %v152 = vmax.f32 %v151, 0.0
    %s153 = sld [smem:[#allocation3 + $0x2]]
    %v154 = vstv %s153
    %v155 = vmul.f32 %v152, %v154
    %v156 = vadd.f32 %v72, %v97
    %v157 = vsub.f32 %v156, %v120
    %v158 = vmax.f32 %v157, 0.0
    %s159 = sld [smem:[#allocation3 + $0x3]]
    %v160 = vstv %s159
    %v161 = vmul.f32 %v158, %v160
    %v162 = vadd.f32 %v73, %v95
    %v163 = vsub.f32 %v162, %v119
    %v164 = vmax.f32 %v163, 0.0
    %s165 = sld [smem:[#allocation3 + $0x4]]
    %v166 = vstv %s165
    %v167 = vmul.f32 %v164, %v166
    %v168 = vadd.f32 %v143, %v167
    %v169 = vadd.f32 %v73, %v96
    %v170 = vsub.f32 %v169, %v120
    %v171 = vmax.f32 %v170, 0.0
    %s172 = sld [smem:[#allocation3 + $0x5]]
    %v173 = vstv %s172
    %v174 = vmul.f32 %v171, %v173
    %v175 = vadd.f32 %v149, %v174
    %v176 = vadd.f32 %v73, %v97
    %v177 = vsub.f32 %v176, %v121
    %v178 = vmax.f32 %v177, 0.0
    %s179 = sld [smem:[#allocation3 + $0x6]]
    %v180 = vstv %s179
    %v181 = vmul.f32 %v178, %v180
    %v182 = vadd.f32 %v155, %v181
    %v183 = vadd.f32 %v73, %v98
    %v184 = vsub.f32 %v183, %v122
    %v185 = vmax.f32 %v184, 0.0
    %s186 = sld [smem:[#allocation3 + $0x7]]
    %v187 = vstv %s186
    %v188 = vmul.f32 %v185, %v187
    %v189 = vadd.f32 %v161, %v188
    %v190 = vadd.f32 %v74, %v97
    %v191 = vsub.f32 %v190, %v122
    %v192 = vmax.f32 %v191, 0.0
    %s193 = sld [smem:[#allocation3 + $0x8]]
    %v194 = vstv %s193
    %v195 = vmul.f32 %v192, %v194
    %v196 = vadd.f32 %v168, %v195
    %v197 = vadd.f32 %v71, %v98
    %v198 = vadd.f32 %v72, %v98
    %v199 = vadd.f32 %v74, %v95
    %v200 = vadd.f32 %v74, %v96
    %v201 = vsub.f32 %v197, %v132
    %v202 = vmax.f32 %v201, 0.0
    %v203 = vadd.f32 %v175, %v202
    %v204 = vsub.f32 %v197, %v137
    %v205 = vmax.f32 %v204, 0.0
    %v206 = vadd.f32 %v182, %v205
    %v207 = vsub.f32 %v198, %v127
    %v208 = vmax.f32 %v207, 0.0
    %v209 = vadd.f32 %v189, %v208
    %v210 = vsub.f32 %v198, %v137
    %v211 = vmax.f32 %v210, 0.0
    %v212 = vadd.f32 %v196, %v211
    %v213 = vsub.f32 %v199, %v132
    %v214 = vmax.f32 %v213, 0.0
    %v215 = vadd.f32 %v203, %v214
    %v216 = vsub.f32 %v199, %v137
    %v217 = vmax.f32 %v216, 0.0
    %v218 = vadd.f32 %v206, %v217
    %v219 = vsub.f32 %v200, %v127
    %v220 = vmax.f32 %v219, 0.0
    %v221 = vadd.f32 %v209, %v220
    %v222 = vsub.f32 %v200, %v137
    %v223 = vmax.f32 %v222, 0.0
    %v224 = vadd.f32 %v212, %v223
    %v225 = vadd.f32 %v224, %v215
    %v226 = vadd.f32 %v218, %v221
    %v227 = vadd.f32 %v225, %v226
    %228 = vst [vmem:[#allocation7] sm:$0xff] %v227
    // Predicated region
    $region10: #{_run.1} parent=1 // pred_check
      _
    $region11: #{_run.1} parent=1 // pred_check_branch
      %230 = sbr.rel (0) target = $region13
    $region12: #{_run.1} parent=1 // pred_region
      %s232 = ssub.s32 128, 128
      %233 = vsyncadd [#allocation6], %s232
      %s235 = sshll.u32 [#allocation7], 4
      %s236 = int_to_ptr.vmem [resolvable:$true] %s235
      %238 = dma.vmem_to_hbm [thread:$0]  %s236, 128, %s2, [#allocation6]
    $region13: #{_run.1} parent=1 // pred_fallthru
      _
    // Predicated region
    $region14: #{_run.1} parent=1 // pred_check
      _
    $region15: #{_run.1} parent=1 // pred_check_branch
      %240 = sbr.rel (0) target = $region17
    $region16: #{_run.1} parent=1 // pred_region
      %241 = dma.done [#allocation6], 128
    $region17: #{_run.1} parent=1 // pred_fallthru
      _
    %242 = vsyncpa [#allocation5], 1
    %243 = vsyncpa [#allocation6], 1

</llo_original>
